<compile_context>
chip_gen: v7x
topology: tpu7x:2x2x1
jax: 0.10.0
libtpu: 0.0.40
codegen_flags: <defaults>
</compile_context>

<pallas_src>
import jax
import jax.numpy as jnp
from jax.experimental import pallas as pl
from jax.experimental.pallas import tpu as pltpu


def _cdiv(a, b):
    return (a + b - 1) // b


def _round_up(a, b):
    return _cdiv(a, b) * b


def write_unit_kernel(memories_ref, controls_ref, retrieved_ref,
                      w_all_ref, b_all_ref,
                      attn_w_ref, ctrl_w_ref, ctrl_b_ref,
                      out_ref):
    M = memories_ref.shape[0]                      # number of memory steps (static)

    memories = memories_ref[...]                   # [M, BT, D]
    prev_mem = memories[M - 1]                     # [BT, D]
    retrieved = retrieved_ref[...]                 # [BT, D]
    c_last = controls_ref[M]                       # [BT, D]
    ctrls = controls_ref[:M]                       # [M, BT, D]

    # ---- self-attention over steps: VPU mul + lane (XLU) reduce, vectorized
    # over the step axis.  attn bias dropped: uniform pre-softmax shift is a
    # mathematical no-op.
    wc = c_last * attn_w_ref[...]                                        # [BT, D]
    logits = jnp.sum(wc[None, :, :] * ctrls, axis=-1, keepdims=True)     # [M, BT, 1]
    m_max = jnp.max(logits, axis=0)                                      # [BT, 1]
    exps = jnp.exp(logits - m_max[None, :, :])                           # [M, BT, 1]
    inv = pl.reciprocal(jnp.sum(exps, axis=0), approx=True)              # [BT, 1]
    attn_mem = jnp.sum((exps * inv[None, :, :]) * memories, axis=0)      # [BT, D]

    # ---- fused next_mem = mem(attn_mem) + concat(cat([retrieved, prev_mem]))
    # as ONE deep-K matmul: x = [attn_mem | retrieved | prev_mem]  [BT, 3D],
    # W = [mem_w ; concat_w]  [3D, D], bias = mem_b + concat_b (pre-summed).
    x_cat = jnp.concatenate([attn_mem, retrieved, prev_mem], axis=-1)    # [BT, 3D] f32
    next_mem = (jnp.dot(x_cat.astype(w_all_ref.dtype), w_all_ref[...],
                        preferred_element_type=jnp.float32)
                + b_all_ref[...])                                        # [BT, D]

    # ---- memory gate: VPU mul + lane reduce + sigmoid (bias from SMEM) ----
    g_logit = (jnp.sum(c_last * ctrl_w_ref[...], axis=-1, keepdims=True)
               + ctrl_b_ref[0, 0])                                       # [BT, 1]
    gate = jax.nn.sigmoid(g_logit)

    out_ref[...] = gate * prev_mem + (1.0 - gate) * next_mem


def prepare_write_unit_params(concat_w, concat_b, attn_w, attn_b,
                              mem_w, mem_b, ctrl_w, ctrl_b,
                              matmul_dtype=jnp.bfloat16):
    """One-time (per model / per weight update) repacking of the weights.

    attn_b is accepted for interface parity but is a mathematical no-op
    (uniform shift before softmax) and is dropped.
    """
    del attn_b
    f32 = jnp.float32
    D = mem_w.shape[0]
    # Stacked weight slab for the fused deep-K matmul (rows: attn_mem,
    # retrieved, prev_mem -> mem_w on top of concat_w).  bf16 for the MXU.
    w_all = jnp.concatenate([mem_w.astype(f32), concat_w.astype(f32)],
                            axis=0).astype(matmul_dtype)                 # [3D, D]
    b_all = (mem_b.reshape(1, D) + concat_b.reshape(1, D)).astype(f32)   # [1, D]
    attn_w_row = attn_w.reshape(1, D).astype(f32)                        # [1, D]
    ctrl_w_row = ctrl_w.reshape(1, D).astype(f32)                        # [1, D]
    ctrl_b_sc = ctrl_b.reshape(1, 1).astype(f32)                         # [1, 1] SMEM
    return (w_all, b_all, attn_w_row, ctrl_w_row, ctrl_b_sc)


def write_unit(memories, controls, retrieved, params):
    """Pallas-backed WriteUnit forward (self_attention=True, memory_gate=True)."""
    w_all, b_all, attn_w_row, ctrl_w_row, ctrl_b_sc = params
    M, B, D = memories.shape
    f32 = jnp.float32

    # ---- batch tiling: multiple-of-8 rows; >= 2 grid steps at moderate B so
    # the parallel grid axis spans both v7x TensorCores; capped at 128 rows
    # per block so large batches keep double-buffered DMA/compute overlap. ----
    if B <= 8:
        BT = _round_up(max(B, 1), 8)
    elif B <= 256:
        BT = _round_up(_cdiv(B, 2), 8)
    else:
        BT = 128
    Bp = _round_up(B, BT)
    grid = (Bp // BT,)

    memories_f = memories.astype(f32)
    controls_f = controls.astype(f32)
    retrieved_f = retrieved.astype(f32)
    if Bp != B:
        pb = Bp - B
        memories_f = jnp.pad(memories_f, ((0, 0), (0, pb), (0, 0)))
        controls_f = jnp.pad(controls_f, ((0, 0), (0, pb), (0, 0)))
        retrieved_f = jnp.pad(retrieved_f, ((0, pb), (0, 0)))

    # VMEM budget: double-buffered activation blocks + weight slabs + margin.
    w_itemsize = jnp.dtype(w_all.dtype).itemsize
    act_block_bytes = (M * BT * D + (M + 1) * BT * D + BT * D + BT * D) * 4
    weight_bytes = 3 * D * D * w_itemsize + 3 * D * 4
    vmem_limit = int(min(2 * (act_block_bytes + weight_bytes) + (8 << 20),
                         64 << 20))

    out_p = pl.pallas_call(
        write_unit_kernel,
        out_shape=jax.ShapeDtypeStruct((Bp, D), f32),
        grid=grid,
        in_specs=[
            pl.BlockSpec((M, BT, D), lambda i: (0, i, 0)),
            pl.BlockSpec((M + 1, BT, D), lambda i: (0, i, 0)),
            pl.BlockSpec((BT, D), lambda i: (i, 0)),
            pl.BlockSpec((3 * D, D), lambda i: (0, 0)),
            pl.BlockSpec((1, D), lambda i: (0, 0)),
            pl.BlockSpec((1, D), lambda i: (0, 0)),
            pl.BlockSpec((1, D), lambda i: (0, 0)),
            pl.BlockSpec((1, 1), lambda i: (0, 0),
                         memory_space=pltpu.MemorySpace.SMEM),
        ],
        out_specs=pl.BlockSpec((BT, D), lambda i: (i, 0)),
        compiler_params=pltpu.CompilerParams(
            dimension_semantics=("parallel",),
            vmem_limit_bytes=vmem_limit),
    )(memories_f, controls_f, retrieved_f,
      w_all, b_all, attn_w_row, ctrl_w_row, ctrl_b_sc)

    return out_p[:B] if Bp != B else out_p


# ---- pure-JAX reference, mirrors the PyTorch forward exactly (all f32) ----
def write_unit_ref(memories, controls, retrieved,
                   concat_w, concat_b, attn_w, attn_b,
                   mem_w, mem_b, ctrl_w, ctrl_b):
    prev_mem = memories[-1]                                          # [B, D]
    concat = (jnp.concatenate([retrieved, prev_mem], axis=1) @ concat_w
              + concat_b)                                            # [B, D]
    controls_cat = jnp.stack(list(controls[:-1]), axis=2)            # [B, D, M]
    attn_in = controls[-1][:, :, None] * controls_cat                # [B, D, M]
    attn = (jnp.transpose(attn_in, (0, 2, 1)) @ attn_w) + attn_b     # [B, M, 1]
    attn = jax.nn.softmax(attn, axis=1)
    attn = jnp.transpose(attn, (0, 2, 1))                            # [B, 1, M]
    memories_cat = jnp.stack(list(memories), axis=2)                 # [B, D, M]
    attn_mem = (attn * memories_cat).sum(axis=2)                     # [B, D]
    next_mem = attn_mem @ mem_w + mem_b + concat
    gate = jax.nn.sigmoid(controls[-1] @ ctrl_w + ctrl_b)            # [B, 1]
    return gate * prev_mem + (1.0 - gate) * next_mem


def xavier_uniform(key, shape):
    fan_in, fan_out = shape
    bound = (6.0 / (fan_in + fan_out)) ** 0.5
    return jax.random.uniform(key, shape, jnp.float32, -bound, bound)


if __name__ == "__main__":
    B, D, M = 8, 32, 3          # batch, hidden dim, number of MAC steps so far
    key = jax.random.PRNGKey(0)
    keys = jax.random.split(key, 8)

    memories = jax.random.normal(keys[0], (M, B, D), jnp.float32)
    controls = jax.random.normal(keys[1], (M + 1, B, D), jnp.float32)
    retrieved = jax.random.normal(keys[2], (B, D), jnp.float32)

    # Deterministic parameter init (xavier_uniform weights, zero biases),
    # stored transposed as [in_dim, out_dim].
    concat_w = xavier_uniform(keys[3], (2 * D, D))
    concat_b = jnp.zeros((1, D), jnp.float32)
    attn_w = xavier_uniform(keys[4], (D, 1))
    attn_b = jnp.zeros((1, 1), jnp.float32)
    mem_w = xavier_uniform(keys[5], (D, D))
    mem_b = jnp.zeros((1, D), jnp.float32)
    ctrl_w = xavier_uniform(keys[6], (D, 1))
    ctrl_b = jnp.zeros((1, 1), jnp.float32)

    # Weight repacking hoisted out of the forward path (done once per model).
    params = prepare_write_unit_params(concat_w, concat_b, attn_w, attn_b,
                                       mem_w, mem_b, ctrl_w, ctrl_b)

    out = write_unit(memories, controls, retrieved, params)
    out = jax.block_until_ready(out)

    ref = write_unit_ref(memories, controls, retrieved,
                         concat_w, concat_b, attn_w, attn_b,
                         mem_w, mem_b, ctrl_w, ctrl_b)
    assert out.shape == (B, D)
    # Tolerance loosened because the fused matmul runs with bf16 MXU operands
    # (f32 accumulation) and the softmax uses the approx EUP reciprocal.
    assert jnp.allclose(out, ref, atol=2e-2, rtol=2e-2), "mismatch vs reference"
    print("KERNEL_OK")
</pallas_src>

<mosaic_0001>
module attributes {stable_mosaic.version = 11 : i64} {
  func.func @write_unit_kernel(%arg0: i32, %arg1: memref<3x8x32xf32, #tpu.memory_space<vmem>>, %arg2: memref<4x8x32xf32, #tpu.memory_space<vmem>>, %arg3: memref<8x32xf32, #tpu.memory_space<vmem>>, %arg4: memref<96x32xbf16, #tpu.memory_space<vmem>>, %arg5: memref<1x32xf32, #tpu.memory_space<vmem>>, %arg6: memref<1x32xf32, #tpu.memory_space<vmem>>, %arg7: memref<1x32xf32, #tpu.memory_space<vmem>>, %arg8: memref<1x1xf32, #tpu.memory_space<smem>>, %arg9: memref<8x32xf32, #tpu.memory_space<vmem>>) attributes {dimension_semantics = [#tpu.dimension_semantics<parallel>], iteration_bounds = array<i64: 1>, scalar_prefetch = 0 : i64, scratch_operands = 0 : i64, tpu.core_type = #tpu.core_type<tc>, window_params = [{transform_indices = @transform_0, window_bounds = array<i64: 3, 8, 32>}, {transform_indices = @transform_1, window_bounds = array<i64: 4, 8, 32>}, {transform_indices = @transform_2, window_bounds = array<i64: 8, 32>}, {pipeline_mode = #tpu.pipeline_mode<synchronous>, transform_indices = @transform_3, window_bounds = array<i64: 96, 32>}, {pipeline_mode = #tpu.pipeline_mode<synchronous>, transform_indices = @transform_4, window_bounds = array<i64: 1, 32>}, {pipeline_mode = #tpu.pipeline_mode<synchronous>, transform_indices = @transform_5, window_bounds = array<i64: 1, 32>}, {pipeline_mode = #tpu.pipeline_mode<synchronous>, transform_indices = @transform_6, window_bounds = array<i64: 1, 32>}, {transform_indices = @transform_7, window_bounds = array<i64: 1, 1>}, {transform_indices = @transform_8, window_bounds = array<i64: 8, 32>}]} {
    %c0 = arith.constant 0 : index
    %c0_0 = arith.constant 0 : index
    %c0_1 = arith.constant 0 : index
    %0 = vector.load %arg1[%c0, %c0_0, %c0_1] : memref<3x8x32xf32, #tpu.memory_space<vmem>>, vector<3x8x32xf32>
    %1 = vector.extract_strided_slice %0 {offsets = [2, 0, 0], sizes = [1, 8, 32], strides = [1, 1, 1]} : vector<3x8x32xf32> to vector<1x8x32xf32>
    %2 = vector.shape_cast %1 : vector<1x8x32xf32> to vector<8x32xf32>
    %c0_2 = arith.constant 0 : index
    %c0_3 = arith.constant 0 : index
    %3 = vector.load %arg3[%c0_2, %c0_3] : memref<8x32xf32, #tpu.memory_space<vmem>>, vector<8x32xf32>
    %c3 = arith.constant 3 : index
    %c0_4 = arith.constant 0 : index
    %c0_5 = arith.constant 0 : index
    %4 = vector.load %arg2[%c3, %c0_4, %c0_5] : memref<4x8x32xf32, #tpu.memory_space<vmem>>, vector<1x8x32xf32>
    %5 = vector.shape_cast %4 : vector<1x8x32xf32> to vector<8x32xf32>
    %c0_6 = arith.constant 0 : index
    %c0_7 = arith.constant 0 : index
    %c0_8 = arith.constant 0 : index
    %6 = vector.load %arg2[%c0_6, %c0_7, %c0_8] : memref<4x8x32xf32, #tpu.memory_space<vmem>>, vector<3x8x32xf32>
    %c0_9 = arith.constant 0 : index
    %c0_10 = arith.constant 0 : index
    %7 = vector.load %arg6[%c0_9, %c0_10] : memref<1x32xf32, #tpu.memory_space<vmem>>, vector<1x32xf32>
    %8 = vector.broadcast %7 : vector<1x32xf32> to vector<8x32xf32>
    %9 = arith.mulf %5, %8 : vector<8x32xf32>
    %10 = vector.shape_cast %9 : vector<8x32xf32> to vector<1x8x32xf32>
    %11 = vector.broadcast %10 : vector<1x8x32xf32> to vector<3x8x32xf32>
    %12 = arith.mulf %11, %6 : vector<3x8x32xf32>
    %cst = arith.constant dense<0.000000e+00> : vector<3x8xf32>
    %13 = vector.multi_reduction <add>, %12, %cst [2] : vector<3x8x32xf32> to vector<3x8xf32>
    %14 = vector.shape_cast %13 : vector<3x8xf32> to vector<3x8x1xf32>
    %cst_11 = arith.constant dense<0xFF800000> : vector<8x1xf32>
    %15 = vector.multi_reduction <maximumf>, %14, %cst_11 [0] : vector<3x8x1xf32> to vector<8x1xf32>
    %16 = vector.shape_cast %15 : vector<8x1xf32> to vector<1x8x1xf32>
    %17 = vector.broadcast %16 : vector<1x8x1xf32> to vector<3x8x1xf32>
    %18 = arith.subf %14, %17 : vector<3x8x1xf32>
    %19 = math.exp %18 : vector<3x8x1xf32>
    %cst_12 = arith.constant dense<0.000000e+00> : vector<8x1xf32>
    %20 = vector.multi_reduction <add>, %19, %cst_12 [0] : vector<3x8x1xf32> to vector<8x1xf32>
    %21 = tpu.reciprocal %20 {approx = true} : vector<8x1xf32> -> vector<8x1xf32>
    %22 = vector.shape_cast %21 : vector<8x1xf32> to vector<1x8x1xf32>
    %23 = vector.broadcast %22 : vector<1x8x1xf32> to vector<3x8x1xf32>
    %24 = arith.mulf %19, %23 : vector<3x8x1xf32>
    %25 = vector.broadcast %24 : vector<3x8x1xf32> to vector<3x8x32xf32>
    %26 = arith.mulf %25, %0 : vector<3x8x32xf32>
    %cst_13 = arith.constant dense<0.000000e+00> : vector<8x32xf32>
    %27 = vector.multi_reduction <add>, %26, %cst_13 [0] : vector<3x8x32xf32> to vector<8x32xf32>
    %28 = tpu.concatenate %27, %3, %2 in 1 : vector<8x32xf32>, vector<8x32xf32>, vector<8x32xf32> -> vector<8x96xf32>
    %29 = arith.truncf %28 : vector<8x96xf32> to vector<8x96xbf16>
    %c0_14 = arith.constant 0 : index
    %c0_15 = arith.constant 0 : index
    %30 = vector.load %arg4[%c0_14, %c0_15] : memref<96x32xbf16, #tpu.memory_space<vmem>>, vector<96x32xbf16>
    %cst_16 = arith.constant dense<0.000000e+00> : vector<8x32xf32>
    %31 = tpu.matmul %29, %30, %cst_16 {dimension_numbers = #tpu.dot_dimension_numbers<[1], [0], [0], [1], [0, 0, 1, 1], [], []>} : vector<8x96xbf16>, vector<96x32xbf16>, vector<8x32xf32> -> vector<8x32xf32>
    %c0_17 = arith.constant 0 : index
    %c0_18 = arith.constant 0 : index
    %32 = vector.load %arg5[%c0_17, %c0_18] : memref<1x32xf32, #tpu.memory_space<vmem>>, vector<1x32xf32>
    %33 = vector.broadcast %32 : vector<1x32xf32> to vector<8x32xf32>
    %34 = arith.addf %31, %33 : vector<8x32xf32>
    %c0_19 = arith.constant 0 : index
    %c0_20 = arith.constant 0 : index
    %35 = vector.load %arg7[%c0_19, %c0_20] : memref<1x32xf32, #tpu.memory_space<vmem>>, vector<1x32xf32>
    %36 = vector.broadcast %35 : vector<1x32xf32> to vector<8x32xf32>
    %37 = arith.mulf %5, %36 : vector<8x32xf32>
    %cst_21 = arith.constant dense<0.000000e+00> : vector<8xf32>
    %38 = vector.multi_reduction <add>, %37, %cst_21 [1] : vector<8x32xf32> to vector<8xf32>
    %39 = vector.shape_cast %38 : vector<8xf32> to vector<8x1xf32>
    %c0_22 = arith.constant 0 : index
    %c0_23 = arith.constant 0 : index
    %40 = memref.load %arg8[%c0_22, %c0_23] : memref<1x1xf32, #tpu.memory_space<smem>>
    %41 = vector.broadcast %40 : f32 to vector<8x1xf32>
    %42 = arith.addf %39, %41 : vector<8x1xf32>
    %43 = arith.negf %42 : vector<8x1xf32>
    %44 = math.exp %43 : vector<8x1xf32>
    %cst_24 = arith.constant 1.000000e+00 : f32
    %45 = vector.broadcast %cst_24 : f32 to vector<8x1xf32>
    %46 = arith.addf %45, %44 : vector<8x1xf32>
    %47 = arith.divf %45, %46 : vector<8x1xf32>
    %48 = vector.broadcast %47 : vector<8x1xf32> to vector<8x32xf32>
    %49 = arith.mulf %48, %2 : vector<8x32xf32>
    %cst_25 = arith.constant 1.000000e+00 : f32
    %50 = vector.broadcast %cst_25 : f32 to vector<8x1xf32>
    %51 = arith.subf %50, %47 : vector<8x1xf32>
    %52 = vector.broadcast %51 : vector<8x1xf32> to vector<8x32xf32>
    %53 = arith.mulf %52, %34 : vector<8x32xf32>
    %54 = arith.addf %49, %53 : vector<8x32xf32>
    %c0_26 = arith.constant 0 : index
    %c0_27 = arith.constant 0 : index
    %55 = vector.load %arg9[%c0_26, %c0_27] : memref<8x32xf32, #tpu.memory_space<vmem>>, vector<8x32xf32>
    tpu.vector_store %arg9[%c0_26, %c0_27], %54 {strides = array<i32>} : memref<8x32xf32, #tpu.memory_space<vmem>>, vector<8x32xf32>,
    return
  }
  func.func @transform_0(%arg0: i32) -> (i32, i32, i32) {
    %c0_i32 = arith.constant 0 : i32
    %c0_i32_0 = arith.constant 0 : i32
    %c0_i32_1 = arith.constant 0 : i32
    return %c0_i32, %arg0, %c0_i32_0 : i32, i32, i32
  }
  func.func @transform_1(%arg0: i32) -> (i32, i32, i32) {
    %c0_i32 = arith.constant 0 : i32
    %c0_i32_0 = arith.constant 0 : i32
    %c0_i32_1 = arith.constant 0 : i32
    return %c0_i32, %arg0, %c0_i32_0 : i32, i32, i32
  }
  func.func @transform_2(%arg0: i32) -> (i32, i32) {
    %c0_i32 = arith.constant 0 : i32
    %c0_i32_0 = arith.constant 0 : i32
    return %arg0, %c0_i32 : i32, i32
  }
  func.func @transform_3(%arg0: i32) -> (i32, i32) {
    %c0_i32 = arith.constant 0 : i32
    %c0_i32_0 = arith.constant 0 : i32
    %c0_i32_1 = arith.constant 0 : i32
    return %c0_i32, %c0_i32_0 : i32, i32
  }
  func.func @transform_4(%arg0: i32) -> (i32, i32) {
    %c0_i32 = arith.constant 0 : i32
    %c0_i32_0 = arith.constant 0 : i32
    %c0_i32_1 = arith.constant 0 : i32
    return %c0_i32, %c0_i32_0 : i32, i32
  }
  func.func @transform_5(%arg0: i32) -> (i32, i32) {
    %c0_i32 = arith.constant 0 : i32
    %c0_i32_0 = arith.constant 0 : i32
    %c0_i32_1 = arith.constant 0 : i32
    return %c0_i32, %c0_i32_0 : i32, i32
  }
  func.func @transform_6(%arg0: i32) -> (i32, i32) {
    %c0_i32 = arith.constant 0 : i32
    %c0_i32_0 = arith.constant 0 : i32
    %c0_i32_1 = arith.constant 0 : i32
    return %c0_i32, %c0_i32_0 : i32, i32
  }
  func.func @transform_7(%arg0: i32) -> (i32, i32) {
    %c0_i32 = arith.constant 0 : i32
    %c0_i32_0 = arith.constant 0 : i32
    %c0_i32_1 = arith.constant 0 : i32
    return %c0_i32, %c0_i32_0 : i32, i32
  }
  func.func @transform_8(%arg0: i32) -> (i32, i32) {
    %c0_i32 = arith.constant 0 : i32
    %c0_i32_0 = arith.constant 0 : i32
    return %arg0, %c0_i32 : i32, i32
  }
}

</mosaic_0001>

<llo_original>
// kernel: tpu_custom_call.1
$region0: #{tpu_custom_call.1}
  #allocation0 [shape = 'u32[]', space=smem, size = 0x4, offset = 0x4, fixed_abs, tag = 'smem constant byte address 0x4 - core index']
  #allocation1 [shape = 'u32[144,128]{1,0:T(1,128)}', space=vmem, size = 0x12000, scoped, tag = 'internal scratch']
  #allocation2 [shape = 'f32[1,1]{1,0:T(1,128)S(6)}', space=smem, size = 0x200, scoped, tag = 'scoped memory for tpu_custom_call.1']
  %s0 = inlined_call_operand.vmem [shape: f32[3,8,32], index: 0, kind: input, shape index: {}]
  %s1 = inlined_call_operand.vmem [shape: f32[4,8,32], index: 1, kind: input, shape index: {}]
  %s2 = inlined_call_operand.vmem [shape: f32[8,32], index: 2, kind: input, shape index: {}]
  %s3 = inlined_call_operand.vmem [shape: bf16[96,32], index: 3, kind: input, shape index: {}]
  %s4 = inlined_call_operand.vmem [shape: f32[1,32], index: 4, kind: input, shape index: {}]
  %s5 = inlined_call_operand.vmem [shape: f32[1,32], index: 5, kind: input, shape index: {}]
  %s6 = inlined_call_operand.vmem [shape: f32[1,32], index: 6, kind: input, shape index: {}]
  %s7 = inlined_call_operand.<no memory space> [shape: f32[1,1], index: 7, kind: input, shape index: {}]
  %s8 = inlined_call_operand.hbm [shape: f32[8,32], index: 8, kind: output, shape index: {}]
  %s9 = sld [smem:[#allocation0]]
  $region42: #{tpu_custom_call.1} parent=0
    _
  %s11 = ssub.s32 1, %s9
  %s12 = scalar_select 0, %s11, %s9
  %13 = sst [smem:[#allocation2]] %s7
  $region1: #{tpu_custom_call.1} parent=0
    #allocation3 [shape = 'u8[4096]{0}', space=vmem, size = 0x1000, scoped, tag = 'output window, operand 0, single buffered']
    #allocation4 [shape = 's32[1]{0}', space=sflag, size = 0x4, scoped, tag = 'scoped memory for tpu_custom_call.1']
    %14 = vsyncpa [#allocation4], 0
    // Predicated region
    $region2: #{tpu_custom_call.1} parent=1 // pred_check
      _
    $region3: #{tpu_custom_call.1} parent=1 // pred_check_branch
      %16 = sbr.rel (0) target = $region5
    $region4: #{tpu_custom_call.1} parent=1 // pred_region
      _
    $region5: #{tpu_custom_call.1} parent=1 // pred_fallthru
      _
    // Predicated region
    $region6: #{tpu_custom_call.1} parent=1 // pred_check
      _
    $region7: #{tpu_custom_call.1} parent=1 // pred_check_branch
      %18 = sbr.rel (0) target = $region9
    $region8: #{tpu_custom_call.1} parent=1 // pred_region
      _
    $region9: #{tpu_custom_call.1} parent=1 // pred_fallthru
      _
    // Predicated region
    $region10: #{tpu_custom_call.1} parent=1 // pred_check
      _
    $region11: #{tpu_custom_call.1} parent=1 // pred_check_branch
      %20 = sbr.rel (0) target = $region13
    $region12: #{tpu_custom_call.1} parent=1 // pred_region
      _
    $region13: #{tpu_custom_call.1} parent=1 // pred_fallthru
      _
    // Predicated region
    $region14: #{tpu_custom_call.1} parent=1 // pred_check
      _
    $region15: #{tpu_custom_call.1} parent=1 // pred_check_branch
      %22 = sbr.rel (0) target = $region17
    $region16: #{tpu_custom_call.1} parent=1 // pred_region
      _
    $region17: #{tpu_custom_call.1} parent=1 // pred_fallthru
      _
    // Predicated region
    $region18: #{tpu_custom_call.1} parent=1 // pred_check
      _
    $region19: #{tpu_custom_call.1} parent=1 // pred_check_branch
      %24 = sbr.rel (0) target = $region21
    $region20: #{tpu_custom_call.1} parent=1 // pred_region
      _
    $region21: #{tpu_custom_call.1} parent=1 // pred_fallthru
      _
    // Predicated region
    $region22: #{tpu_custom_call.1} parent=1 // pred_check
      _
    $region23: #{tpu_custom_call.1} parent=1 // pred_check_branch
      %26 = sbr.rel (0) target = $region25
    $region24: #{tpu_custom_call.1} parent=1 // pred_region
      _
    $region25: #{tpu_custom_call.1} parent=1 // pred_fallthru
      _
    // Predicated region
    $region26: #{tpu_custom_call.1} parent=1 // pred_check
      _
    $region27: #{tpu_custom_call.1} parent=1 // pred_check_branch
      %28 = sbr.rel (0) target = $region29
    $region28: #{tpu_custom_call.1} parent=1 // pred_region
      _
    $region29: #{tpu_custom_call.1} parent=1 // pred_fallthru
      _
    // Predicated region
    $region30: #{tpu_custom_call.1} parent=1 // pred_check
      _
    $region31: #{tpu_custom_call.1} parent=1 // pred_check_branch
      %30 = sbr.rel (0) target = $region33
    $region32: #{tpu_custom_call.1} parent=1 // pred_region
      _
    $region33: #{tpu_custom_call.1} parent=1 // pred_fallthru
      _
    %v32 = vld [vmem:[%s0] sm:$0xff]
    %v33 = vld [vmem:[%s0 + $0x8] sm:$0xff]
    %v34 = vld [vmem:[%s0 + $0x10] sm:$0xff]
    %v35 = vld [vmem:[%s2] sm:$0xff]
    %s36 = scalar_lea.vmem %s1, 24
    %v37 = vld [vmem:[%s36] sm:$0xff]
    %v38 = vld [vmem:[%s1] sm:$0xff]
    %v39 = vld [vmem:[%s1 + $0x8] sm:$0xff]
    %v40 = vld [vmem:[%s1 + $0x10] sm:$0xff]
    %v41 = vld [vmem:[%s5] sm:$0x1]
    %v43 = vlaneseq
    %v44 = vshrl.u32 %v43, 7
    %v45 = vsub.s32 0, %v44
    %v46 = vrot.slane %v41, %v45
    %v48 = vmul.f32 %v37, %v46
    %v49 = vmul.f32 %v48, %v38
    %v50 = vmul.f32 %v48, %v39
    %v51 = vmul.f32 %v48, %v40
    %vm52 = vcmask 261120
    %v53 = vsel %vm52, %v49, 0.0
    %54 = vadd.xlane.f32.xlu0 %v53
    %v55 = vpop.xlane.xlu0 %54
    %v56 = vsel %vm52, %v50, 0.0
    %57 = vadd.xlane.f32.xlu0 %v56
    %v58 = vpop.xlane.xlu0 %57
    %v59 = vsel %vm52, %v51, 0.0
    %60 = vadd.xlane.f32.xlu0 %v59
    %v61 = vpop.xlane.xlu0 %60
    %v62 = vmax.f32 %v55, %v58
    %v63 = vmax.f32 %v62, %v61
    %v64 = vsub.f32 %v55, %v63
    %v65 = vsub.f32 %v58, %v63
    %v66 = vsub.f32 %v61, %v63
    %v67 = vmul.f32 %v64, 1.442695
    %v68 = vpow.pop %v67
    %v69 = vmul.f32 %v65, 1.442695
    %v70 = vpow.pop %v69
    %v71 = vmul.f32 %v66, 1.442695
    %v72 = vpow.pop %v71
    %v73 = vadd.f32 %v68, %v70
    %v74 = vadd.f32 %v73, %v72
    %v75 = vrcp.pop %v74
    %v76 = vmul.f32 %v68, %v75
    %v77 = vmul.f32 %v70, %v75
    %v78 = vmul.f32 %v72, %v75
    %v79 = vmul.f32 %v76, %v32
    %v80 = vmul.f32 %v77, %v33
    %v81 = vmul.f32 %v78, %v34
    %v82 = vsel %vm52, %v79, 0.0
    %v83 = vsel %vm52, %v80, 0.0
    %v84 = vadd.f32 %v82, %v83
    %v85 = vsel %vm52, %v81, 0.0
    %v86 = vadd.f32 %v84, %v85
    %88 = vrot.lane.b32.xlu0 %v35, 32
    %v89 = vpop.permute.xlu0 %88
    %92 = vrot.lane.b32.xlu0 %v34, 64
    %v93 = vpop.permute.xlu0 %92
    %v95 = vsel %vm52, %v86, %v89
    %vm96 = vcmask 523264
    %v97 = vsel %vm96, %v95, %v93
    %v98 = vpack.c.bf16 %v97, %v97
    %v99 = vld [vmem:[%s3] sm:$0xf]
    %v100 = vld [vmem:[%s3 + $0x4] sm:$0xf]
    %v101 = vld [vmem:[%s3 + $0x8] sm:$0xf]
    %v102 = vld [vmem:[%s3 + $0xc] sm:$0xf]
    %v103 = vld [vmem:[%s3 + $0x10] sm:$0xf]
    %v104 = vld [vmem:[%s3 + $0x14] sm:$0xf]
    %v105 = vld [vmem:[%s3 + $0x18] sm:$0xf]
    %v106 = vld [vmem:[%s3 + $0x1c] sm:$0xf]
    %v107 = vld [vmem:[%s3 + $0x20] sm:$0xf]
    %v108 = vld [vmem:[%s3 + $0x24] sm:$0xf]
    %v109 = vld [vmem:[%s3 + $0x28] sm:$0xf]
    %v110 = vld [vmem:[%s3 + $0x2c] sm:$0xf]
    %v111 = vld [vmem:[%s4] sm:$0x1]
    %v113 = vlaneseq
    %v114 = vshrl.u32 %v113, 7
    %v115 = vsub.s32 0, %v114
    %v116 = vrot.slane %v111, %v115
    %v130 = vunpack.c.l.b16 %v99
    %v131 = vunpack.c.l.b16 %v100
    %v132 = vunpack.c.l.b16 %v101
    %v133 = vunpack.c.l.b16 %v102
    %v134 = vunpack.c.l.b16 %v103
    %v135 = vunpack.c.l.b16 %v104
    %v136 = vunpack.c.l.b16 %v105
    %v137 = vunpack.c.l.b16 %v106
    %v138 = vunpack.c.l.b16 %v107
    %v139 = vunpack.c.l.b16 %v108
    %v140 = vunpack.c.l.b16 %v109
    %v141 = vunpack.c.l.b16 %v110
    %v142 = vpack.c.b16 %v131, %v130
    %v143 = vpack.c.b16 %v133, %v132
    %v144 = vpack.c.b16 %v135, %v134
    %v145 = vpack.c.b16 %v137, %v136
    %v146 = vpack.c.b16 %v139, %v138
    %v147 = vpack.c.b16 %v141, %v140
    %vm154 = vcmask 785408
    %v156 = vsel %vm154, %v98, 0
    %158 = vmatprep.subr.bf16.mxu0 0
    %159 = vmatpush1.bf16.msra.mxu0 %v142
    %160 = vmatprep.subr.bf16.mxu0 0
    %161 = vmatpush1.bf16.msra.mxu0 %v143
    %162 = vmatprep.subr.bf16.mxu0 0
    %163 = vmatpush1.bf16.msra.mxu0 %v144
    %164 = vmatprep.subr.bf16.mxu0 0
    %165 = vmatpush1.bf16.msra.mxu0 %v145
    %166 = vmatprep.subr.bf16.mxu0 0
    %167 = vmatpush1.bf16.msra.mxu0 %v146
    %168 = vmatprep.subr.bf16.mxu0 0
    %169 = vmatpush1.bf16.msra.mxu0 %v147
    %170 = vmatprep.subr.bf16.mxu0 0
    %171 = vmatpush1.bf16.msra.mxu0 0
    %172 = vmatprep.subr.bf16.mxu0 0
    %173 = vmatpush1.bf16.msra.mxu0 0
    %174 = vmatprep.subr.bf16.mxu0 0
    %175 = vmatpush1.bf16.msra.mxu0 0
    %176 = vmatprep.subr.bf16.mxu0 0
    %177 = vmatpush1.bf16.msra.mxu0 0
    %178 = vmatprep.subr.bf16.mxu0 0
    %179 = vmatpush1.bf16.msra.mxu0 0
    %180 = vmatprep.subr.bf16.mxu0 0
    %181 = vmatpush1.bf16.msra.mxu0 0
    %182 = vmatprep.subr.bf16.mxu0 0
    %183 = vmatpush1.bf16.msra.mxu0 0
    %184 = vmatprep.subr.bf16.mxu0 0
    %185 = vmatpush1.bf16.msra.mxu0 0
    %186 = vmatprep.subr.bf16.mxu0 0
    %187 = vmatpush1.bf16.msra.mxu0 0
    %188 = vmatprep.subr.bf16.mxu0 0
    %189 = vmatpush1.bf16.msra.mxu0 0
    %190 = vmatprep.mubr.bf16.mxu0 0
    %191 = vmatmul.mubr.bf16.gmra.mrb[0].mxu0 %v156
    %v192 = vpop.f32.mrb[0].mxu0
    %v193 = vadd.f32 %v116, %v192
    %v194 = vpop.f32.mrb[0].mxu0
    %v195 = vpop.f32.mrb[0].mxu0
    %v196 = vpop.f32.mrb[0].mxu0
    %197 = vdwg.mxu0
    %v198 = vld [vmem:[%s6] sm:$0x1]
    %v200 = vlaneseq
    %v201 = vshrl.u32 %v200, 7
    %v202 = vsub.s32 0, %v201
    %v203 = vrot.slane %v198, %v202
    %v205 = vmul.f32 %v37, %v203
    %v206 = vsel %vm52, %v205, 0.0
    %207 = vadd.xlane.f32.xlu0 %v206
    %v208 = vpop.xlane.xlu0 %207
    %s209 = sld [smem:[#allocation2]]
    %v210 = vstv %s209
    %v211 = vadd.f32 %v208, %v210
    %v212 = vxor.u32 %v211, 2147483648
    %v213 = vmul.f32 %v212, 1.442695
    %v214 = vpow.pop %v213
    %v215 = vadd.f32 %v214, 1.0
    %v216 = vrcp.pop %v215
    %v217 = vmul.f32 1.0, %v216
    %v218 = vmul.f32 %v217, %v34
    %v219 = vsub.f32 1.0, %v217
    %v220 = vmul.f32 %v219, %v193
    %v221 = vadd.f32 %v218, %v220
    %222 = vst.msk [vmem:[#allocation3] sm:$0xff] %vm52, %v221
    // Predicated region
    $region34: #{tpu_custom_call.1} parent=1 // pred_check
      _
    $region35: #{tpu_custom_call.1} parent=1 // pred_check_branch
      %224 = sbr.rel (0) target = $region37
    $region36: #{tpu_custom_call.1} parent=1 // pred_region
      %s226 = ssub.s32 128, 128
      %227 = vsyncadd [#allocation4], %s226
      %s229 = sshll.u32 [#allocation3], 4
      %s230 = int_to_ptr.vmem [resolvable:$true] %s229
      %232 = dma.vmem_to_hbm [thread:$0]  %s230, 128, %s8, [#allocation4]
    $region37: #{tpu_custom_call.1} parent=1 // pred_fallthru
      _
    // Predicated region
    $region38: #{tpu_custom_call.1} parent=1 // pred_check
      _
    $region39: #{tpu_custom_call.1} parent=1 // pred_check_branch
      %234 = sbr.rel (0) target = $region41
    $region40: #{tpu_custom_call.1} parent=1 // pred_region
      %235 = dma.done [#allocation4], 128
    $region41: #{tpu_custom_call.1} parent=1 // pred_fallthru
      _
    %236 = vsyncpa [#allocation4], 1

</llo_original>
